<compile_context>
chip_gen: v5e
topology: v5e:2x2
jax: 0.10.0
libtpu: 0.0.40
codegen_flags: <defaults>
</compile_context>

<pallas_src>
import functools

import jax
import jax.numpy as jnp
from jax.experimental import pallas as pl
from jax.experimental.pallas import tpu as pltpu


def _rps_kernel(logits_ref, tgt_ref, tri_ref, out_ref, *,
                alpha_ce, beta_rps, batch_size):
    x = logits_ref[...].astype(jnp.float32)          # (TB, C)
    tgt = tgt_ref[...].astype(jnp.int32)              # (TB, 1)
    TB, C = x.shape

    # valid-row mask: handles B not being a multiple of the batch tile.
    row = (jax.lax.broadcasted_iota(jnp.int32, (TB, 1), 0)
           + pl.program_id(0) * TB)                    # global row index
    valid = (row < batch_size).astype(jnp.float32)     # (TB, 1)

    # class-index grid, shared by one-hot mask and cum-label step function
    col = jax.lax.broadcasted_iota(jnp.int32, (TB, C), 1)
    onehot_mask = (col == tgt)                          # (TB, C) bool

    # numerically stable softmax / log-sum-exp along class axis
    m = jnp.max(x, axis=-1, keepdims=True)
    ex = jnp.exp(x - m)
    s = jnp.sum(ex, axis=-1, keepdims=True)
    probs = ex * pl.reciprocal(s, approx=True)          # softmax(inputs, dim=1)
    logsumexp = jnp.log(s) + m                           # (TB, 1)

    # cross-entropy per row: logsumexp - logit[target]
    tgt_logit = jnp.sum(jnp.where(onehot_mask, x, 0.0), axis=-1, keepdims=True)
    ce_sum = jnp.sum((logsumexp - tgt_logit) * valid)

    # cumsum along class axis via resident lower-triangular bf16 matmul (MXU):
    #   cumsum(p)[b, j] = sum_k p[b, k] * [k <= j]
    cum_probs = jnp.dot(probs.astype(jnp.bfloat16), tri_ref[...],
                        preferred_element_type=jnp.float32)   # (TB, C) f32

    # cumsum of one-hot is a step function: 1 where j >= target
    cum_labels = (col >= tgt).astype(jnp.float32)        # (TB, C)

    diff = cum_labels - cum_probs
    rps_sum = jnp.sum(jnp.sum(diff * diff, axis=-1, keepdims=True) * valid)

    partial = alpha_ce * ce_sum + beta_rps * rps_sum
    # lane-dense write (full (8,128) tile) -> unmasked vst; wrapper reads [i,0,0].
    out_ref[...] = jnp.full(out_ref.shape, partial, dtype=jnp.float32)


def rps_loss(logits, targets, alpha_ce=1.0, beta_rps=1.0, block_b=None):
    """logits: (B, C) float; targets: (B,) int. Returns scalar f32 loss
    equal to alpha_ce * CE(mean) + beta_rps * RPS(mean)."""
    B, C = logits.shape
    align = 16 if jnp.dtype(logits.dtype).itemsize == 2 else 8

    if block_b is None:
        # keep double-buffered logits around <= ~8 MiB f32 equivalent
        cap = max(align, ((1 << 20) // max(C, 1)) // align * align)
        block_b = min(512, cap)
    # never tile larger than the (padded) batch
    block_b = max(align, (block_b // align) * align)
    block_b = min(block_b, -(-B // align) * align)

    num_tiles = -(-B // block_b)
    b_pad = num_tiles * block_b
    if b_pad != B:
        logits = jnp.pad(logits, ((0, b_pad - B), (0, 0)))
        targets = jnp.pad(targets, (0, b_pad - B))
    tgt2d = targets.astype(jnp.int32).reshape(b_pad, 1)

    # resident lower-triangular cumsum matrix (0/1 values are exact in bf16)
    tri = (jax.lax.broadcasted_iota(jnp.int32, (C, C), 0)
           <= jax.lax.broadcasted_iota(jnp.int32, (C, C), 1)).astype(jnp.bfloat16)

    kernel = functools.partial(
        _rps_kernel, alpha_ce=float(alpha_ce), beta_rps=float(beta_rps),
        batch_size=B)

    partials = pl.pallas_call(
        kernel,
        out_shape=jax.ShapeDtypeStruct((num_tiles, 8, 128), jnp.float32),
        grid=(num_tiles,),
        in_specs=[
            pl.BlockSpec((block_b, C), lambda i: (i, 0)),   # pipelined per tile
            pl.BlockSpec((block_b, 1), lambda i: (i, 0)),
            pl.BlockSpec((C, C), lambda i: (0, 0)),         # resident across grid
        ],
        out_specs=pl.BlockSpec((1, 8, 128), lambda i: (i, 0, 0)),
        compiler_params=pltpu.CompilerParams(
            dimension_semantics=("parallel",)),
    )(logits, tgt2d, tri)

    # independent per-tile partial sums -> reduce in JAX, divide by true B
    return jnp.sum(partials[:, 0, 0]) / B


def _reference(logits, targets, alpha_ce=1.0, beta_rps=1.0):
    B, C = logits.shape
    logp = jax.nn.log_softmax(logits, axis=1)
    ce = -jnp.mean(logp[jnp.arange(B), targets])
    onehot = jax.nn.one_hot(targets, C)
    probs = jax.nn.softmax(logits, axis=1)
    rps = jnp.mean(jnp.sum(
        (jnp.cumsum(onehot, axis=-1) - jnp.cumsum(probs, axis=-1)) ** 2, axis=-1))
    return alpha_ce * ce + beta_rps * rps


if __name__ == "__main__":
    key = jax.random.PRNGKey(0)
    k1, k2, k3, k4 = jax.random.split(key, 4)

    # small shape consistent with the module: logits (B, C), targets (B,)
    B, C = 8, 16
    logits = jax.random.normal(k1, (B, C), dtype=jnp.float32)
    targets = jax.random.randint(k2, (B,), 0, C, dtype=jnp.int32)

    loss = rps_loss(logits, targets, alpha_ce=1.0, beta_rps=1.0)
    jax.block_until_ready(loss)
    ref = _reference(logits, targets)
    # bf16 MXU cumsum -> loosen tolerance vs pure-f32 reference
    assert jnp.allclose(loss, ref, rtol=3e-2, atol=3e-2), (loss, ref)

    # exercise multi-tile grid + padded-row masking (B not a multiple of TB)
    B2, C2 = 20, 16
    logits2 = jax.random.normal(k3, (B2, C2), dtype=jnp.float32)
    targets2 = jax.random.randint(k4, (B2,), 0, C2, dtype=jnp.int32)
    loss2 = rps_loss(logits2, targets2, alpha_ce=0.7, beta_rps=1.3, block_b=8)
    jax.block_until_ready(loss2)
    ref2 = _reference(logits2, targets2, alpha_ce=0.7, beta_rps=1.3)
    assert jnp.allclose(loss2, ref2, rtol=3e-2, atol=3e-2), (loss2, ref2)

    print("KERNEL_OK")
</pallas_src>

<mosaic_0001>
module attributes {stable_mosaic.version = 11 : i64} {
  func.func @_rps_kernel(%arg0: i32, %arg1: memref<8x16xf32, #tpu.memory_space<vmem>>, %arg2: memref<8x1xi32, #tpu.memory_space<vmem>>, %arg3: memref<16x16xbf16, #tpu.memory_space<vmem>>, %arg4: memref<1x8x128xf32, #tpu.memory_space<vmem>>) attributes {dimension_semantics = [#tpu.dimension_semantics<parallel>], iteration_bounds = array<i64: 1>, scalar_prefetch = 0 : i64, scratch_operands = 0 : i64, tpu.core_type = #tpu.core_type<tc>, window_params = [{transform_indices = @transform_0, window_bounds = array<i64: 8, 16>}, {transform_indices = @transform_1, window_bounds = array<i64: 8, 1>}, {pipeline_mode = #tpu.pipeline_mode<synchronous>, transform_indices = @transform_2, window_bounds = array<i64: 16, 16>}, {transform_indices = @transform_3, window_bounds = array<i64: 1, 8, 128>}]} {
    %c0 = arith.constant 0 : index
    %c0_0 = arith.constant 0 : index
    %0 = vector.load %arg1[%c0, %c0_0] : memref<8x16xf32, #tpu.memory_space<vmem>>, vector<8x16xf32>
    %c0_1 = arith.constant 0 : index
    %c0_2 = arith.constant 0 : index
    %1 = vector.load %arg2[%c0_1, %c0_2] : memref<8x1xi32, #tpu.memory_space<vmem>>, vector<8x1xi32>
    %2 = tpu.iota {dimensions = array<i32: 0>} : vector<8x1xi32>
    %c8_i32 = arith.constant 8 : i32
    %3 = arith.muli %arg0, %c8_i32 : i32
    %4 = vector.broadcast %3 : i32 to vector<8x1xi32>
    %5 = arith.addi %2, %4 : vector<8x1xi32>
    %c8_i32_3 = arith.constant 8 : i32
    %6 = vector.broadcast %c8_i32_3 : i32 to vector<8x1xi32>
    %7 = arith.cmpi slt, %5, %6 : vector<8x1xi32>
    %8 = arith.extui %7 : vector<8x1xi1> to vector<8x1xi32>
    %9 = arith.sitofp %8 : vector<8x1xi32> to vector<8x1xf32>
    %10 = tpu.iota {dimensions = array<i32: 1>} : vector<8x16xi32>
    %11 = vector.broadcast %1 : vector<8x1xi32> to vector<8x16xi32>
    %12 = arith.cmpi eq, %10, %11 : vector<8x16xi32>
    %cst = arith.constant dense<0xFF800000> : vector<8xf32>
    %13 = vector.multi_reduction <maximumf>, %0, %cst [1] : vector<8x16xf32> to vector<8xf32>
    %14 = vector.shape_cast %13 : vector<8xf32> to vector<8x1xf32>
    %15 = vector.broadcast %14 : vector<8x1xf32> to vector<8x16xf32>
    %16 = arith.subf %0, %15 : vector<8x16xf32>
    %17 = math.exp %16 : vector<8x16xf32>
    %cst_4 = arith.constant dense<0.000000e+00> : vector<8xf32>
    %18 = vector.multi_reduction <add>, %17, %cst_4 [1] : vector<8x16xf32> to vector<8xf32>
    %19 = vector.shape_cast %18 : vector<8xf32> to vector<8x1xf32>
    %20 = tpu.reciprocal %19 {approx = true} : vector<8x1xf32> -> vector<8x1xf32>
    %21 = vector.broadcast %20 : vector<8x1xf32> to vector<8x16xf32>
    %22 = arith.mulf %17, %21 : vector<8x16xf32>
    %23 = math.log %19 : vector<8x1xf32>
    %24 = arith.addf %23, %14 : vector<8x1xf32>
    %cst_5 = arith.constant 0.000000e+00 : f32
    %25 = vector.broadcast %cst_5 : f32 to vector<8x16xf32>
    %26 = arith.select %12, %0, %25 : vector<8x16xi1>, vector<8x16xf32>
    %cst_6 = arith.constant dense<0.000000e+00> : vector<8xf32>
    %27 = vector.multi_reduction <add>, %26, %cst_6 [1] : vector<8x16xf32> to vector<8xf32>
    %28 = vector.shape_cast %27 : vector<8xf32> to vector<8x1xf32>
    %29 = arith.subf %24, %28 : vector<8x1xf32>
    %30 = arith.mulf %29, %9 : vector<8x1xf32>
    %31 = vector.shape_cast %30 : vector<8x1xf32> to vector<1x8x1xf32>
    %cst_7 = arith.constant dense<0.000000e+00> : vector<1xf32>
    %32 = vector.multi_reduction <add>, %31, %cst_7 [1, 2] : vector<1x8x1xf32> to vector<1xf32>
    %33 = vector.shape_cast %32 : vector<1xf32> to vector<1x1x1xf32>
    %34 = vector.extract %33[0, 0, 0] : f32 from vector<1x1x1xf32>
    %35 = arith.truncf %22 : vector<8x16xf32> to vector<8x16xbf16>
    %c0_8 = arith.constant 0 : index
    %c0_9 = arith.constant 0 : index
    %36 = vector.load %arg3[%c0_8, %c0_9] : memref<16x16xbf16, #tpu.memory_space<vmem>>, vector<16x16xbf16>
    %cst_10 = arith.constant dense<0.000000e+00> : vector<8x16xf32>
    %37 = tpu.matmul %35, %36, %cst_10 {dimension_numbers = #tpu.dot_dimension_numbers<[1], [0], [0], [1], [0, 0, 1, 1], [], []>} : vector<8x16xbf16>, vector<16x16xbf16>, vector<8x16xf32> -> vector<8x16xf32>
    %38 = vector.broadcast %1 : vector<8x1xi32> to vector<8x16xi32>
    %39 = arith.cmpi sge, %10, %38 : vector<8x16xi32>
    %40 = arith.extui %39 : vector<8x16xi1> to vector<8x16xi32>
    %41 = arith.sitofp %40 : vector<8x16xi32> to vector<8x16xf32>
    %42 = arith.subf %41, %37 : vector<8x16xf32>
    %43 = arith.mulf %42, %42 : vector<8x16xf32>
    %cst_11 = arith.constant dense<0.000000e+00> : vector<8xf32>
    %44 = vector.multi_reduction <add>, %43, %cst_11 [1] : vector<8x16xf32> to vector<8xf32>
    %45 = vector.shape_cast %44 : vector<8xf32> to vector<8x1xf32>
    %46 = arith.mulf %45, %9 : vector<8x1xf32>
    %47 = vector.shape_cast %46 : vector<8x1xf32> to vector<1x8x1xf32>
    %cst_12 = arith.constant dense<0.000000e+00> : vector<1xf32>
    %48 = vector.multi_reduction <add>, %47, %cst_12 [1, 2] : vector<1x8x1xf32> to vector<1xf32>
    %49 = vector.shape_cast %48 : vector<1xf32> to vector<1x1x1xf32>
    %50 = vector.extract %49[0, 0, 0] : f32 from vector<1x1x1xf32>
    %cst_13 = arith.constant 1.000000e+00 : f32
    %51 = arith.mulf %cst_13, %34 : f32
    %cst_14 = arith.constant 1.000000e+00 : f32
    %52 = arith.mulf %cst_14, %50 : f32
    %53 = arith.addf %51, %52 : f32
    %54 = vector.broadcast %53 : f32 to vector<1x8x128xf32>
    %c0_15 = arith.constant 0 : index
    %c0_16 = arith.constant 0 : index
    %c0_17 = arith.constant 0 : index
    %55 = vector.load %arg4[%c0_15, %c0_16, %c0_17] : memref<1x8x128xf32, #tpu.memory_space<vmem>>, vector<1x8x128xf32>
    tpu.vector_store %arg4[%c0_15, %c0_16, %c0_17], %54 {strides = array<i32>} : memref<1x8x128xf32, #tpu.memory_space<vmem>>, vector<1x8x128xf32>,
    return
  }
  func.func @transform_0(%arg0: i32) -> (i32, i32) {
    %c0_i32 = arith.constant 0 : i32
    %c0_i32_0 = arith.constant 0 : i32
    return %arg0, %c0_i32 : i32, i32
  }
  func.func @transform_1(%arg0: i32) -> (i32, i32) {
    %c0_i32 = arith.constant 0 : i32
    %c0_i32_0 = arith.constant 0 : i32
    return %arg0, %c0_i32 : i32, i32
  }
  func.func @transform_2(%arg0: i32) -> (i32, i32) {
    %c0_i32 = arith.constant 0 : i32
    %c0_i32_0 = arith.constant 0 : i32
    %c0_i32_1 = arith.constant 0 : i32
    return %c0_i32, %c0_i32_0 : i32, i32
  }
  func.func @transform_3(%arg0: i32) -> (i32, i32, i32) {
    %c0_i32 = arith.constant 0 : i32
    %c0_i32_0 = arith.constant 0 : i32
    %c0_i32_1 = arith.constant 0 : i32
    return %arg0, %c0_i32, %c0_i32_0 : i32, i32, i32
  }
}

</mosaic_0001>

<llo_original>
// kernel: tpu_custom_call.1
$region0: #{tpu_custom_call.1}
  #allocation0 [shape = 'u32[]', space=smem, size = 0x4, offset = 0x4, fixed_abs, tag = 'smem constant byte address 0x4 - core index']
  #allocation1 [shape = 'u32[72,128]{1,0:T(1,128)}', space=vmem, size = 0x9000, scoped, tag = 'internal scratch']
  %s0 = inlined_call_operand.vmem [shape: f32[8,16], index: 0, kind: input, shape index: {}]
  %s1 = inlined_call_operand.vmem [shape: s32[8,1], index: 1, kind: input, shape index: {}]
  %s2 = inlined_call_operand.hbm [shape: bf16[16,16], index: 2, kind: input, shape index: {}]
  %s3 = inlined_call_operand.hbm [shape: f32[1,8,128], index: 3, kind: output, shape index: {}]
  %s4 = sld [smem:[#allocation0]]
  $region26: #{tpu_custom_call.1} parent=0
    _
  %s6 = ssub.s32 1, %s4
  %s7 = scalar_select 0, %s6, %s4
  $region1: #{tpu_custom_call.1} parent=0
    #allocation2 [shape = 'u8[4096]{0}', space=vmem, size = 0x1000, scoped, tag = 'input window, operand 2, single buffered']
    #allocation3 [shape = 's32[1]{0}', space=sflag, size = 0x4, scoped, tag = 'scoped memory for tpu_custom_call.1']
    #allocation4 [shape = 's32[1]{0}', space=sflag, size = 0x4, scoped, tag = 'scoped memory for tpu_custom_call.1']
    #allocation5 [shape = 'u8[4096]{0}', space=vmem, size = 0x1000, scoped, tag = 'output window, operand 0, single buffered']
    %8 = vsyncpa [#allocation3], 0
    %9 = vsyncpa [#allocation4], 0
    // Predicated region
    $region2: #{tpu_custom_call.1} parent=1 // pred_check
      _
    $region3: #{tpu_custom_call.1} parent=1 // pred_check_branch
      %11 = sbr.rel (0) target = $region5
    $region4: #{tpu_custom_call.1} parent=1 // pred_region
      _
    $region5: #{tpu_custom_call.1} parent=1 // pred_fallthru
      _
    // Predicated region
    $region6: #{tpu_custom_call.1} parent=1 // pred_check
      _
    $region7: #{tpu_custom_call.1} parent=1 // pred_check_branch
      %13 = sbr.rel (0) target = $region9
    $region8: #{tpu_custom_call.1} parent=1 // pred_region
      _
    $region9: #{tpu_custom_call.1} parent=1 // pred_fallthru
      _
    // Predicated region
    $region10: #{tpu_custom_call.1} parent=1 // pred_check
      _
    $region11: #{tpu_custom_call.1} parent=1 // pred_check_branch
      %15 = sbr.rel (0) target = $region13
    $region12: #{tpu_custom_call.1} parent=1 // pred_region
      %17 = vsyncadd [#allocation3], 0
      %s18 = sshll.u32 %s2, 4
      %s19 = int_to_ptr.hbm [resolvable:$true] %s18
      %s20 = sshll.u32 [#allocation2], 4
      %s21 = int_to_ptr.vmem [resolvable:$true] %s20
      %26 = dma.hbm_to_vmem [thread:$0]  %s19, 128, %s21, [#allocation3], 64, 64, 4
    $region13: #{tpu_custom_call.1} parent=1 // pred_fallthru
      _
    // Predicated region
    $region14: #{tpu_custom_call.1} parent=1 // pred_check
      _
    $region15: #{tpu_custom_call.1} parent=1 // pred_check_branch
      %28 = sbr.rel (0) target = $region17
    $region16: #{tpu_custom_call.1} parent=1 // pred_region
      %30 = dma.done [#allocation3], 128
    $region17: #{tpu_custom_call.1} parent=1 // pred_fallthru
      _
    %v32 = vld [vmem:[%s0] sm:$0xff]
    %v33 = vld [vmem:[%s1] sm:$0xff]
    %v34 = vlaneseq
    %v35 = vshrl.u32 %v34, 7
    %s36 = smul.u32 0, 8
    %v37 = vstv %s36
    %v38 = vadd.s32 %v35, %v37
    %vm39 = vcmp.lt.s32.totalorder %v38, 8
    %v40 = vsel %vm39, 1, 0
    %v41 = vcvt.s32.f32 %v40
    %v42 = vlaneseq
    %v43 = vand.u32 %v42, 127
    %44 = vset.pattern.permute.xlu0 0
    %45 = vperm.xlu0 %44, %v33
    %v46 = vpop.permute.xlu0 %45
    %vm47 = vcmp.eq.s32.totalorder %v43, %v46
    %vm48 = vcmask 130048
    %v49 = vsel %vm48, %v32, -inf
    %50 = vmax.xlane.f32.xlu0 %v49
    %v51 = vpop.xlane.xlu0 %50
    %v52 = vsub.f32 %v32, %v51
    %v53 = vmul.f32 %v52, 1.442695
    %v54 = vpow.pop %v53
    %v55 = vsel %vm48, %v54, 0.0
    %56 = vadd.xlane.f32.xlu0 %v55
    %v57 = vpop.xlane.xlu0 %56
    %v58 = vrcp.pop %v57
    %v59 = vmul.f32 %v54, %v58
    %v60 = vlog2.pop %v57
    %v61 = vmul.f32 %v60, 0.6931472
    %v62 = vadd.f32 %v61, %v51
    %v63 = vsel %vm47, %v32, 0.0
    %v64 = vsel %vm48, %v63, 0.0
    %65 = vadd.xlane.f32.xlu0 %v64
    %v66 = vpop.xlane.xlu0 %65
    %v67 = vsub.f32 %v62, %v66
    %v68 = vmul.f32 %v67, %v41
    %vm69 = vcmask 7168
    %v70 = vsel %vm69, %v68, 0.0
    %71 = vadd.xlane.f32.xlu0 %v70
    %v72 = vpop.xlane.xlu0 %71
    %v73 = vrot.slane %v72, 4
    %v74 = vadd.f32 %v72, %v73
    %v75 = vrot.slane %v74, 2
    %v76 = vadd.f32 %v74, %v75
    %v77 = vrot.slane %v76, 1
    %v78 = vadd.f32 %v76, %v77
    %s79 = vtos %v78
    %v80 = vpack.c.bf16 %v59, %v59
    %v81 = vld [vmem:[#allocation2] sm:$0xf]
    %v82 = vld [vmem:[#allocation2 + $0x4] sm:$0xf]
    %v85 = vunpack.c.l.b16 %v81
    %v86 = vunpack.c.l.b16 %v82
    %v87 = vpack.c.b16 %v86, %v85
    %v90 = vsel %vm48, %v80, 0
    %92 = vmatpush.bf16.msra.mxu0 0
    %93 = vmatpush.bf16.msra.mxu0 0
    %94 = vmatpush.bf16.msra.mxu0 0
    %95 = vmatpush.bf16.msra.mxu0 0
    %96 = vmatpush.bf16.msra.mxu0 0
    %97 = vmatpush.bf16.msra.mxu0 0
    %98 = vmatpush.bf16.msra.mxu0 0
    %99 = vmatpush.bf16.msra.mxu0 %v87
    %100 = vmatmul.bf16.gmra.mxu0 %v90
    %v101 = vpop.f32.mrf.mxu0
    %v102 = vadd.f32 0.0, %v101
    %v103 = vpop.f32.mrf.mxu0
    %104 = vdwg.mxu0
    %vm105 = vcmp.ge.s32.totalorder %v43, %v46
    %v106 = vsel %vm105, 1, 0
    %v107 = vcvt.s32.f32 %v106
    %v108 = vsub.f32 %v107, %v102
    %v109 = vmul.f32 %v108, %v108
    %v110 = vsel %vm48, %v109, 0.0
    %111 = vadd.xlane.f32.xlu0 %v110
    %v112 = vpop.xlane.xlu0 %111
    %v113 = vmul.f32 %v112, %v41
    %v114 = vsel %vm69, %v113, 0.0
    %115 = vadd.xlane.f32.xlu0 %v114
    %v116 = vpop.xlane.xlu0 %115
    %v117 = vrot.slane %v116, 4
    %v118 = vadd.f32 %v116, %v117
    %v119 = vrot.slane %v118, 2
    %v120 = vadd.f32 %v118, %v119
    %v121 = vrot.slane %v120, 1
    %v122 = vadd.f32 %v120, %v121
    %s123 = vtos %v122
    %s124 = sadd.f32 %s79, %s123
    %v125 = vstv %s124
    %126 = vst [vmem:[#allocation5] sm:$0xff] %v125
    // Predicated region
    $region18: #{tpu_custom_call.1} parent=1 // pred_check
      _
    $region19: #{tpu_custom_call.1} parent=1 // pred_check_branch
      %128 = sbr.rel (0) target = $region21
    $region20: #{tpu_custom_call.1} parent=1 // pred_region
      %130 = vsyncadd [#allocation4], 0
      %s132 = sshll.u32 [#allocation5], 4
      %s133 = int_to_ptr.vmem [resolvable:$true] %s132
      %s134 = sshll.u32 %s3, 4
      %s135 = int_to_ptr.hbm [resolvable:$true] %s134
      %137 = dma.vmem_to_hbm [thread:$0]  %s133, 128, %s135, [#allocation4]
    $region21: #{tpu_custom_call.1} parent=1 // pred_fallthru
      _
    // Predicated region
    $region22: #{tpu_custom_call.1} parent=1 // pred_check
      _
    $region23: #{tpu_custom_call.1} parent=1 // pred_check_branch
      %139 = sbr.rel (0) target = $region25
    $region24: #{tpu_custom_call.1} parent=1 // pred_region
      %141 = dma.done [#allocation4], 128
    $region25: #{tpu_custom_call.1} parent=1 // pred_fallthru
      _
    %142 = vsyncpa [#allocation3], 1
    %143 = vsyncpa [#allocation4], 1

</llo_original>
